<compile_context>
chip_gen: v6e
topology: v6e:2x2x1
jax: 0.10.0
libtpu: 0.0.40
codegen_flags: <defaults>
</compile_context>

<pallas_src>
import functools
import math

import jax
import jax.numpy as jnp
from jax import lax
from jax.experimental import pallas as pl
from jax.experimental.pallas import tpu as pltpu

_LANES = 128
_MAX_TM = 1024  # rows per block: 1024*128*4B = 512 KiB per f32 buffer


def _lowbias32(x):
    """Well-mixed 32-bit integer hash (lowbias32), uint32 -> uint32."""
    x = x ^ (x >> jnp.uint32(16))
    x = x * jnp.uint32(0x7FEB352D)
    x = x ^ (x >> jnp.uint32(15))
    x = x * jnp.uint32(0x846CA68B)
    x = x ^ (x >> jnp.uint32(16))
    return x


def _normal_pair(base):
    """Two standard-normal arrays from one uint32 counter array (Box-Muller)."""
    b1 = _lowbias32(base)
    b2 = _lowbias32(base ^ jnp.uint32(0x85EBCA6B))
    # 24 high bits -> uniform floats; u1 in (0, 1] (safe for log), u2 in [0, 1).
    inv24 = jnp.float32(1.0 / (1 << 24))
    u1 = ((b1 >> jnp.uint32(8)).astype(jnp.int32).astype(jnp.float32) + 1.0) * inv24
    u2 = (b2 >> jnp.uint32(8)).astype(jnp.int32).astype(jnp.float32) * inv24
    r = jnp.sqrt(jnp.float32(-2.0) * jnp.log(u1))
    theta = jnp.float32(2.0 * math.pi) * u2
    return r * jnp.cos(theta), r * jnp.sin(theta)


def _noise_kernel(seed_ref, x_ref, o_ref, *, variance, use_both):
    tm, lanes = x_ref.shape
    tile = pl.program_id(0).astype(jnp.uint32)
    seed = seed_ref[0].astype(jnp.uint32) * jnp.uint32(0x9E3779B1)
    v = jnp.float32(variance)

    if use_both:
        # Draw bits for half the rows; each counter yields two normals that
        # fill the top and bottom halves of the block.
        half = tm // 2
        row = lax.broadcasted_iota(jnp.uint32, (half, lanes), 0)
        col = lax.broadcasted_iota(jnp.uint32, (half, lanes), 1)
        base = (tile * jnp.uint32(half * lanes)
                + row * jnp.uint32(lanes) + col) ^ seed
        z1, z2 = _normal_pair(base)
        o_ref[0:half, :] = (
            x_ref[0:half, :].astype(jnp.float32) + v * z1).astype(o_ref.dtype)
        o_ref[half:tm, :] = (
            x_ref[half:tm, :].astype(jnp.float32) + v * z2).astype(o_ref.dtype)
    else:
        # Fallback for odd/tiny row counts: one normal per element.
        row = lax.broadcasted_iota(jnp.uint32, (tm, lanes), 0)
        col = lax.broadcasted_iota(jnp.uint32, (tm, lanes), 1)
        base = (tile * jnp.uint32(tm * lanes)
                + row * jnp.uint32(lanes) + col) ^ seed
        z1, _ = _normal_pair(base)
        o_ref[...] = (x_ref[...].astype(jnp.float32) + v * z1).astype(o_ref.dtype)


def noise_obfuscator(x, seed, variance=1.0, *, alias_input=False):
    """x + variance * N(0, 1) noise, drawn on-chip (counter-based PRNG)."""
    orig_shape = x.shape
    dtype = x.dtype
    total = x.size

    # Lane-dense flat view in NATIVE dtype.  For lane-aligned sizes (the
    # common case, incl. this module's NCHW activations) this is a free
    # reshape: no astype, no padding copy.
    flat = jnp.ravel(x)
    pad = (-total) % _LANES
    if pad:
        # TODO(synk): rare non-lane-aligned tail still pads with a copy;
        # could be handled with a masked partial tile instead.
        flat = jnp.concatenate([flat, jnp.zeros((pad,), dtype)])
    m = flat.size // _LANES
    x2 = flat.reshape(m, _LANES)

    # Big blocks to amortize per-grid-step overhead; block first dim either
    # equals the full array dim (small inputs) or is a multiple of 8.
    tm = _MAX_TM if m >= _MAX_TM else m
    use_both = (tm % 2 == 0) and tm >= 2
    grid = (pl.cdiv(m, tm),)

    kernel = functools.partial(
        _noise_kernel, variance=float(variance), use_both=use_both)

    out2 = pl.pallas_call(
        kernel,
        out_shape=jax.ShapeDtypeStruct((m, _LANES), dtype),
        grid_spec=pltpu.PrefetchScalarGridSpec(
            num_scalar_prefetch=1,
            grid=grid,
            in_specs=[pl.BlockSpec((tm, _LANES), lambda i, seed_ref: (i, 0))],
            out_specs=pl.BlockSpec((tm, _LANES), lambda i, seed_ref: (i, 0)),
        ),
        compiler_params=pltpu.CompilerParams(
            dimension_semantics=("parallel",)),
        # Only safe when the caller no longer needs x (not the case in the
        # self-test below, which computes y - x), so default off.
        input_output_aliases=({1: 0} if alias_input else {}),
    )(jnp.asarray([seed], dtype=jnp.int32), x2)

    if pad:
        out2 = out2.reshape(-1)[:total]
    return out2.reshape(orig_shape)


if __name__ == "__main__":
    key = jax.random.PRNGKey(0)
    # NCHW input, small shapes: batch=2, channels=4, spatial=16x16.
    x = jax.random.normal(key, (2, 4, 16, 16), dtype=jnp.float32)

    variance = 1.0
    y = noise_obfuscator(x, seed=1234, variance=variance)
    y = jax.block_until_ready(y)

    assert y.shape == x.shape and y.dtype == x.dtype
    noise = y - x
    assert bool(jnp.all(jnp.isfinite(noise)))
    # Sanity: noise should not be identically zero and should have ~unit scale.
    assert float(jnp.std(noise)) > 0.1

    print("KERNEL_OK")
</pallas_src>

<mosaic_0001>
module attributes {stable_mosaic.version = 11 : i64} {
  func.func @_noise_kernel(%arg0: i32, %arg1: memref<1xi32, #tpu.memory_space<smem>>, %arg2: memref<16x128xf32, #tpu.memory_space<vmem>>, %arg3: memref<16x128xf32, #tpu.memory_space<vmem>>) attributes {dimension_semantics = [#tpu.dimension_semantics<parallel>], iteration_bounds = array<i64: 1>, scalar_prefetch = 1 : i64, scratch_operands = 0 : i64, tpu.core_type = #tpu.core_type<tc>, window_params = [{transform_indices = @transform_0, window_bounds = array<i64: 16, 128>}, {transform_indices = @transform_1, window_bounds = array<i64: 16, 128>}]} {
    %c0 = arith.constant 0 : index
    %0 = memref.load %arg1[%c0] : memref<1xi32, #tpu.memory_space<smem>>
    %c-1640531535_i32 = arith.constant -1640531535 : i32
    %1 = arith.muli %0, %c-1640531535_i32 : i32
    %2 = tpu.iota {dimensions = array<i32: 0>} : vector<8x128xi32>
    %3 = tpu.iota {dimensions = array<i32: 1>} : vector<8x128xi32>
    %c1024_i32 = arith.constant 1024 : i32
    %4 = arith.muli %arg0, %c1024_i32 : i32
    %c128_i32 = arith.constant 128 : i32
    %5 = vector.broadcast %c128_i32 : i32 to vector<8x128xi32>
    %6 = arith.muli %2, %5 : vector<8x128xi32>
    %7 = vector.broadcast %4 : i32 to vector<8x128xi32>
    %8 = arith.addi %7, %6 : vector<8x128xi32>
    %9 = arith.addi %8, %3 : vector<8x128xi32>
    %10 = vector.broadcast %1 : i32 to vector<8x128xi32>
    %11 = arith.xori %9, %10 : vector<8x128xi32>
    %c16_i32 = arith.constant 16 : i32
    %12 = vector.broadcast %c16_i32 : i32 to vector<8x128xi32>
    %13 = arith.shrui %11, %12 : vector<8x128xi32>
    %14 = arith.xori %11, %13 : vector<8x128xi32>
    %c2146121005_i32 = arith.constant 2146121005 : i32
    %15 = vector.broadcast %c2146121005_i32 : i32 to vector<8x128xi32>
    %16 = arith.muli %14, %15 : vector<8x128xi32>
    %c15_i32 = arith.constant 15 : i32
    %17 = vector.broadcast %c15_i32 : i32 to vector<8x128xi32>
    %18 = arith.shrui %16, %17 : vector<8x128xi32>
    %19 = arith.xori %16, %18 : vector<8x128xi32>
    %c-2073254261_i32 = arith.constant -2073254261 : i32
    %20 = vector.broadcast %c-2073254261_i32 : i32 to vector<8x128xi32>
    %21 = arith.muli %19, %20 : vector<8x128xi32>
    %c16_i32_0 = arith.constant 16 : i32
    %22 = vector.broadcast %c16_i32_0 : i32 to vector<8x128xi32>
    %23 = arith.shrui %21, %22 : vector<8x128xi32>
    %24 = arith.xori %21, %23 : vector<8x128xi32>
    %c-2048144789_i32 = arith.constant -2048144789 : i32
    %25 = vector.broadcast %c-2048144789_i32 : i32 to vector<8x128xi32>
    %26 = arith.xori %11, %25 : vector<8x128xi32>
    %c16_i32_1 = arith.constant 16 : i32
    %27 = vector.broadcast %c16_i32_1 : i32 to vector<8x128xi32>
    %28 = arith.shrui %26, %27 : vector<8x128xi32>
    %29 = arith.xori %26, %28 : vector<8x128xi32>
    %c2146121005_i32_2 = arith.constant 2146121005 : i32
    %30 = vector.broadcast %c2146121005_i32_2 : i32 to vector<8x128xi32>
    %31 = arith.muli %29, %30 : vector<8x128xi32>
    %c15_i32_3 = arith.constant 15 : i32
    %32 = vector.broadcast %c15_i32_3 : i32 to vector<8x128xi32>
    %33 = arith.shrui %31, %32 : vector<8x128xi32>
    %34 = arith.xori %31, %33 : vector<8x128xi32>
    %c-2073254261_i32_4 = arith.constant -2073254261 : i32
    %35 = vector.broadcast %c-2073254261_i32_4 : i32 to vector<8x128xi32>
    %36 = arith.muli %34, %35 : vector<8x128xi32>
    %c16_i32_5 = arith.constant 16 : i32
    %37 = vector.broadcast %c16_i32_5 : i32 to vector<8x128xi32>
    %38 = arith.shrui %36, %37 : vector<8x128xi32>
    %39 = arith.xori %36, %38 : vector<8x128xi32>
    %c8_i32 = arith.constant 8 : i32
    %40 = vector.broadcast %c8_i32 : i32 to vector<8x128xi32>
    %41 = arith.shrui %24, %40 : vector<8x128xi32>
    %42 = arith.sitofp %41 : vector<8x128xi32> to vector<8x128xf32>
    %cst = arith.constant 1.000000e+00 : f32
    %43 = vector.broadcast %cst : f32 to vector<8x128xf32>
    %44 = arith.addf %42, %43 : vector<8x128xf32>
    %cst_6 = arith.constant 5.96046448E-8 : f32
    %45 = vector.broadcast %cst_6 : f32 to vector<8x128xf32>
    %46 = arith.mulf %44, %45 : vector<8x128xf32>
    %c8_i32_7 = arith.constant 8 : i32
    %47 = vector.broadcast %c8_i32_7 : i32 to vector<8x128xi32>
    %48 = arith.shrui %39, %47 : vector<8x128xi32>
    %49 = arith.sitofp %48 : vector<8x128xi32> to vector<8x128xf32>
    %cst_8 = arith.constant 5.96046448E-8 : f32
    %50 = vector.broadcast %cst_8 : f32 to vector<8x128xf32>
    %51 = arith.mulf %49, %50 : vector<8x128xf32>
    %52 = math.log %46 : vector<8x128xf32>
    %cst_9 = arith.constant -2.000000e+00 : f32
    %53 = vector.broadcast %cst_9 : f32 to vector<8x128xf32>
    %54 = arith.mulf %53, %52 : vector<8x128xf32>
    %55 = math.sqrt %54 : vector<8x128xf32>
    %cst_10 = arith.constant 6.28318548 : f32
    %56 = vector.broadcast %cst_10 : f32 to vector<8x128xf32>
    %57 = arith.mulf %56, %51 : vector<8x128xf32>
    %58 = math.cos %57 : vector<8x128xf32>
    %59 = arith.mulf %55, %58 : vector<8x128xf32>
    %60 = math.sin %57 : vector<8x128xf32>
    %61 = arith.mulf %55, %60 : vector<8x128xf32>
    %c0_11 = arith.constant 0 : index
    %c0_12 = arith.constant 0 : index
    %62 = vector.load %arg2[%c0_11, %c0_12] : memref<16x128xf32, #tpu.memory_space<vmem>>, vector<8x128xf32>
    %cst_13 = arith.constant 1.000000e+00 : f32
    %63 = vector.broadcast %cst_13 : f32 to vector<8x128xf32>
    %64 = arith.mulf %63, %59 : vector<8x128xf32>
    %65 = arith.addf %62, %64 : vector<8x128xf32>
    %c0_14 = arith.constant 0 : index
    %c0_15 = arith.constant 0 : index
    %66 = vector.load %arg3[%c0_14, %c0_15] : memref<16x128xf32, #tpu.memory_space<vmem>>, vector<8x128xf32>
    tpu.vector_store %arg3[%c0_14, %c0_15], %65 {strides = array<i32>} : memref<16x128xf32, #tpu.memory_space<vmem>>, vector<8x128xf32>,
    %c8 = arith.constant 8 : index
    %c0_16 = arith.constant 0 : index
    %67 = vector.load %arg2[%c8, %c0_16] : memref<16x128xf32, #tpu.memory_space<vmem>>, vector<8x128xf32>
    %cst_17 = arith.constant 1.000000e+00 : f32
    %68 = vector.broadcast %cst_17 : f32 to vector<8x128xf32>
    %69 = arith.mulf %68, %61 : vector<8x128xf32>
    %70 = arith.addf %67, %69 : vector<8x128xf32>
    %c8_18 = arith.constant 8 : index
    %c0_19 = arith.constant 0 : index
    %71 = vector.load %arg3[%c8_18, %c0_19] : memref<16x128xf32, #tpu.memory_space<vmem>>, vector<8x128xf32>
    tpu.vector_store %arg3[%c8_18, %c0_19], %70 {strides = array<i32>} : memref<16x128xf32, #tpu.memory_space<vmem>>, vector<8x128xf32>,
    return
  }
  func.func @transform_0(%arg0: i32, %arg1: memref<1xi32, #tpu.memory_space<smem>>) -> (i32, i32) {
    %c0_i32 = arith.constant 0 : i32
    %c0_i32_0 = arith.constant 0 : i32
    return %arg0, %c0_i32 : i32, i32
  }
  func.func @transform_1(%arg0: i32, %arg1: memref<1xi32, #tpu.memory_space<smem>>) -> (i32, i32) {
    %c0_i32 = arith.constant 0 : i32
    %c0_i32_0 = arith.constant 0 : i32
    return %arg0, %c0_i32 : i32, i32
  }
}

</mosaic_0001>

<llo_original>
// kernel: tpu_custom_call.1
$region0: #{tpu_custom_call.1}
  #allocation0 [shape = 'u32[]', space=smem, size = 0x4, offset = 0x4, fixed_abs, tag = 'smem constant byte address 0x4 - core index']
  #allocation1 [shape = 'u32[144,128]{1,0:T(1,128)}', space=vmem, size = 0x12000, scoped, tag = 'internal scratch']
  #allocation2 [shape = 's32[1]{0}', space=sflag, size = 0x4, scoped, tag = 'scoped memory for tpu_custom_call.1']
  #allocation3 [shape = 's32[1]{0:T(128)S(6)}', space=smem, size = 0x200, scoped, tag = 'prefetched SMEM operand 0']
  %s0 = inlined_call_operand.<no memory space> [shape: s32[1], index: 0, kind: input, shape index: {}]
  %s1 = inlined_call_operand.hbm [shape: f32[16,128], index: 1, kind: input, shape index: {}]
  %s2 = inlined_call_operand.hbm [shape: f32[16,128], index: 2, kind: output, shape index: {}]
  %s3 = sld [smem:[#allocation0]]
  $region18: #{tpu_custom_call.1} parent=0
    _
  %s5 = ssub.s32 1, %s3
  %s6 = scalar_select 0, %s5, %s3
  %7 = sst [smem:[#allocation3]] %s0
  $region1: #{tpu_custom_call.1} parent=0
    #allocation4 [shape = 'u8[8192]{0}', space=vmem, size = 0x2000, scoped, tag = 'input window, operand 1, single buffered']
    #allocation5 [shape = 's32[1]{0}', space=sflag, size = 0x4, scoped, tag = 'scoped memory for tpu_custom_call.1']
    #allocation6 [shape = 's32[1]{0}', space=sflag, size = 0x4, scoped, tag = 'scoped memory for tpu_custom_call.1']
    #allocation7 [shape = 'u8[8192]{0}', space=vmem, size = 0x2000, scoped, tag = 'output window, operand 0, single buffered']
    %8 = vsyncpa [#allocation5], 0
    %9 = vsyncpa [#allocation6], 0
    // Predicated region
    $region2: #{tpu_custom_call.1} parent=1 // pred_check
      _
    $region3: #{tpu_custom_call.1} parent=1 // pred_check_branch
      %11 = sbr.rel (0) target = $region5
    $region4: #{tpu_custom_call.1} parent=1 // pred_region
      %s13 = ssub.s32 256, 256
      %14 = vsyncadd [#allocation5], %s13
      %s15 = sshll.u32 [#allocation4], 4
      %s16 = int_to_ptr.vmem [resolvable:$true] %s15
      %21 = dma.hbm_to_vmem [thread:$0]  %s1, 256, %s16, [#allocation5], 128, 128, 8
    $region5: #{tpu_custom_call.1} parent=1 // pred_fallthru
      _
    // Predicated region
    $region6: #{tpu_custom_call.1} parent=1 // pred_check
      _
    $region7: #{tpu_custom_call.1} parent=1 // pred_check_branch
      %23 = sbr.rel (0) target = $region9
    $region8: #{tpu_custom_call.1} parent=1 // pred_region
      %24 = dma.done [#allocation5], 256
    $region9: #{tpu_custom_call.1} parent=1 // pred_fallthru
      _
    %s25 = sld [smem:[#allocation3]]
    %s26 = smul.u32 %s25, 2654435761
    %v27 = vlaneseq
    %v28 = vshrl.u32 %v27, 7
    %v29 = vlaneseq
    %v30 = vand.u32 %v29, 127
    %s31 = smul.u32 0, 1024
    %v32 = vmul.u32 %v28, 128
    %v33 = vstv %s31
    %v34 = vadd.s32 %v33, %v32
    %v35 = vadd.s32 %v34, %v30
    %v36 = vstv %s26
    %v37 = vxor.u32 %v35, %v36
    %v38 = vshrl.u32 %v37, 16
    %v39 = vxor.u32 %v37, %v38
    %v40 = vmul.u32 %v39, 2146121005
    %v41 = vshrl.u32 %v40, 15
    %v42 = vxor.u32 %v40, %v41
    %v43 = vmul.u32 %v42, 2221713035
    %v44 = vshrl.u32 %v43, 16
    %v45 = vxor.u32 %v43, %v44
    %v46 = vxor.u32 %v37, 2246822507
    %v47 = vshrl.u32 %v46, 16
    %v48 = vxor.u32 %v46, %v47
    %v49 = vmul.u32 %v48, 2146121005
    %v50 = vshrl.u32 %v49, 15
    %v51 = vxor.u32 %v49, %v50
    %v52 = vmul.u32 %v51, 2221713035
    %v53 = vshrl.u32 %v52, 16
    %v54 = vxor.u32 %v52, %v53
    %v55 = vshrl.u32 %v45, 8
    %v56 = vcvt.s32.f32 %v55
    %v57 = vadd.f32 %v56, 1.0
    %v58 = vmul.f32 %v57, 5.9604645e-08
    %v59 = vshrl.u32 %v54, 8
    %v60 = vcvt.s32.f32 %v59
    %v61 = vmul.f32 %v60, 5.9604645e-08
    %v62 = vlog2.pop %v58
    %v63 = vmul.f32 %v62, 0.6931472
    %v64 = vmul.f32 %v63, -2.0
    %v65 = vrsqrt.pop %v64
    %v66 = vmul.f32 %v64, %v65
    %vm67 = vcmp.eq.f32.partialorder %v64, inf
    %v68 = vsel %vm67, %v64, %v66
    %vm69 = vcmp.eq.f32.partialorder %v64, 0.0
    %v70 = vand.u32 %v64, 2147483648
    %v71 = vsel %vm69, %v70, %v68
    %v72 = vmul.f32 %v61, 6.2831855
    %v73 = vand.u32 2147483647, %v72
    %vm74 = vcmp.le.f32.partialorder %v73, 0.7853982
    %vm75 = vcmp.lt.s32.totalorder %v72, 0
    %v76 = vand.u32 %v72, 2139095040
    %v77 = vshrl.u32 %v76, 23
    %v78 = vsub.s32 %v77, 127
    %v79 = vand.u32 2147483647, %v72
    %v80 = vand.u32 %v79, 8388607
    %v81 = vor.u32 %v80, 8388608
    %v82 = vsub.s32 0, %v81
    %v83 = vadd.s32 %v78, 1
    %vm84 = vcmp.gt.s32.totalorder %v83, 0
    %v85 = vsel %vm84, %v83, 0
    %v86 = vshrl.u32 %v85, 5
    %v87 = vand.u32 %v85, 31
    %v88 = vsub.s32 32, %v87
    %v89 = vshrl.u32 683565275, %v88
    %v90 = vshll.u32 683565275, %v87
    %v91 = vshrl.u32 2475754826, %v88
    %v92 = vor.u32 %v90, %v91
    %v93 = vshll.u32 2475754826, %v87
    %v94 = vshrl.u32 2131351028, %v88
    %v95 = vor.u32 %v93, %v94
    %v96 = vshll.u32 2131351028, %v87
    %v97 = vshrl.u32 2102212464, %v88
    %v98 = vor.u32 %v96, %v97
    %v99 = vshll.u32 2102212464, %v87
    %v100 = vshrl.u32 920167782, %v88
    %v101 = vor.u32 %v99, %v100
    %v102 = vshll.u32 920167782, %v87
    %v103 = vshrl.u32 1326507024, %v88
    %v104 = vor.u32 %v102, %v103
    %vm105 = vcmp.lt.s32.totalorder %v86, 1
    %vm106 = vcmp.lt.s32.totalorder %v86, 2
    %vm107 = vcmp.lt.s32.totalorder %v86, 3
    %vm108 = vcmp.lt.s32.totalorder %v86, 4
    %v109 = vsel %vm105, %v89, %v92
    %v110 = vsel %vm108, %v98, 2102212464
    %v111 = vsel %vm107, %v95, %v110
    %v112 = vsel %vm106, %v109, %v111
    %v113 = vsel %vm105, %v92, %v95
    %v114 = vsel %vm108, %v101, 920167782
    %v115 = vsel %vm107, %v98, %v114
    %v116 = vsel %vm106, %v113, %v115
    %v117 = vsel %vm105, %v95, %v98
    %v118 = vsel %vm108, %v104, 1326507024
    %v119 = vsel %vm107, %v101, %v118
    %v120 = vsel %vm106, %v117, %v119
    %v121 = vshll.u32 %v81, 8
    %v122 = vmul.u32.u64.compose %v121, %v120
    %v123 = vextract.low.u32 %v122
    %v124 = vextract.high.u32 %v122
    %v125 = vmul.u32.u64.compose %v121, %v116
    %v126 = vextract.low.u32 %v125
    %v127 = vextract.high.u32 %v125
    %v128 = vmul.u32 %v121, %v112
    %v129 = vadd.s32 %v124, %v126
    %vm130 = vc.u32 %v124, %v126
    %v131 = vadd.s32 %v127, 1
    %v132 = vsel %vm130, %v131, %v127
    %v133 = vadd.s32 %v128, %v132
    %v134 = vadd.s32 %v133, 536870912
    %v135 = vshrl.u32 %v134, 30
    %v136 = vshll.u32 %v135, 30
    %v137 = vsub.s32 %v133, %v136
    %vm138 = vcmp.lt.s32.totalorder %v137, 0
    %v139 = vsub.s32 0, %v137
    %v140 = vsel %vm138, %v139, %v137
    %v141 = vclz %v140
    %v142 = vsub.s32 %v141, 2
    %vm143 = vcmp.gt.s32.totalorder 0, %v142
    %v144 = vsel %vm143, 0, %v142
    %v145 = vsub.s32 32, %v144
    %v146 = vshll.u32 %v137, %v144
    %v147 = vshrl.u32 %v129, %v145
    %v148 = vor.u32 %v146, %v147
    %v149 = vsub.s32 4294967266, %v144
    %v150 = vadd.s32 %v149, 127
    %v151 = vshll.u32 %v150, 23
    %v152 = vor.u32 4788187, %v151
    %v153 = vand.u32 2147483647, %v152
    %v155 = vcvt.s32.f32 %v148
    %v156 = vmul.f32 %v155, %v153
    %v157 = vxor.u32 %v156, 2147483648
    %v158 = vsel %vm75, %v157, %v156
    %v159 = vsub.s32 4, %v135
    %v160 = vsel %vm75, %v159, %v135
    %v161 = vsel %vm74, %v72, %v158
    %v162 = vsel %vm74, 0, %v160
    %v163 = vcosq.f32.pop %v161
    %v164 = vsinq.f32.pop %v161
    %vm165 = vweird.f32 %v72
    %v166 = vand.u32 %v162, 3
    %vm167 = vcmp.lt.s32.totalorder %v166, 2
    %vm168 = vcmp.eq.s32.totalorder %v166, 0
    %v169 = vxor.u32 %v164, 2147483648
    %v170 = vsel %vm168, %v163, %v169
    %vm171 = vcmp.eq.s32.totalorder %v166, 2
    %v172 = vxor.u32 %v163, 2147483648
    %v173 = vsel %vm171, %v172, %v164
    %v174 = vsel %vm167, %v170, %v173
    %v175 = vsel %vm165, nan, %v174
    %v176 = vmul.f32 %v71, %v175
    %v177 = vand.u32 2147483647, %v72
    %vm178 = vcmp.le.f32.partialorder %v177, 0.7853982
    %vm179 = vcmp.lt.s32.totalorder %v72, 0
    %v180 = vand.u32 %v72, 2139095040
    %v181 = vshrl.u32 %v180, 23
    %v182 = vsub.s32 %v181, 127
    %v183 = vand.u32 2147483647, %v72
    %v184 = vand.u32 %v183, 8388607
    %v185 = vor.u32 %v184, 8388608
    %v186 = vsub.s32 0, %v185
    %v187 = vadd.s32 %v182, 1
    %vm188 = vcmp.gt.s32.totalorder %v187, 0
    %v189 = vsel %vm188, %v187, 0
    %v190 = vshrl.u32 %v189, 5
    %v191 = vand.u32 %v189, 31
    %v192 = vsub.s32 32, %v191
    %v193 = vshrl.u32 683565275, %v192
    %v194 = vshll.u32 683565275, %v191
    %v195 = vshrl.u32 2475754826, %v192
    %v196 = vor.u32 %v194, %v195
    %v197 = vshll.u32 2475754826, %v191
    %v198 = vshrl.u32 2131351028, %v192
    %v199 = vor.u32 %v197, %v198
    %v200 = vshll.u32 2131351028, %v191
    %v201 = vshrl.u32 2102212464, %v192
    %v202 = vor.u32 %v200, %v201
    %v203 = vshll.u32 2102212464, %v191
    %v204 = vshrl.u32 920167782, %v192
    %v205 = vor.u32 %v203, %v204
    %v206 = vshll.u32 920167782, %v191
    %v207 = vshrl.u32 1326507024, %v192
    %v208 = vor.u32 %v206, %v207
    %vm209 = vcmp.lt.s32.totalorder %v190, 1
    %vm210 = vcmp.lt.s32.totalorder %v190, 2
    %vm211 = vcmp.lt.s32.totalorder %v190, 3
    %vm212 = vcmp.lt.s32.totalorder %v190, 4
    %v213 = vsel %vm209, %v193, %v196
    %v214 = vsel %vm212, %v202, 2102212464
    %v215 = vsel %vm211, %v199, %v214
    %v216 = vsel %vm210, %v213, %v215
    %v217 = vsel %vm209, %v196, %v199
    %v218 = vsel %vm212, %v205, 920167782
    %v219 = vsel %vm211, %v202, %v218
    %v220 = vsel %vm210, %v217, %v219
    %v221 = vsel %vm209, %v199, %v202
    %v222 = vsel %vm212, %v208, 1326507024
    %v223 = vsel %vm211, %v205, %v222
    %v224 = vsel %vm210, %v221, %v223
    %v225 = vshll.u32 %v185, 8
    %v226 = vmul.u32.u64.compose %v225, %v224
    %v227 = vextract.low.u32 %v226
    %v228 = vextract.high.u32 %v226
    %v229 = vmul.u32.u64.compose %v225, %v220
    %v230 = vextract.low.u32 %v229
    %v231 = vextract.high.u32 %v229
    %v232 = vmul.u32 %v225, %v216
    %v233 = vadd.s32 %v228, %v230
    %vm234 = vc.u32 %v228, %v230
    %v235 = vadd.s32 %v231, 1
    %v236 = vsel %vm234, %v235, %v231
    %v237 = vadd.s32 %v232, %v236
    %v238 = vadd.s32 %v237, 536870912
    %v239 = vshrl.u32 %v238, 30
    %v240 = vshll.u32 %v239, 30
    %v241 = vsub.s32 %v237, %v240
    %vm242 = vcmp.lt.s32.totalorder %v241, 0
    %v243 = vsub.s32 0, %v241
    %v244 = vsel %vm242, %v243, %v241
    %v245 = vclz %v244
    %v246 = vsub.s32 %v245, 2
    %vm247 = vcmp.gt.s32.totalorder 0, %v246
    %v248 = vsel %vm247, 0, %v246
    %v249 = vsub.s32 32, %v248
    %v250 = vshll.u32 %v241, %v248
    %v251 = vshrl.u32 %v233, %v249
    %v252 = vor.u32 %v250, %v251
    %v253 = vsub.s32 4294967266, %v248
    %v254 = vadd.s32 %v253, 127
    %v255 = vshll.u32 %v254, 23
    %v256 = vor.u32 4788187, %v255
    %v257 = vand.u32 2147483647, %v256
    %v259 = vcvt.s32.f32 %v252
    %v260 = vmul.f32 %v259, %v257
    %v261 = vxor.u32 %v260, 2147483648
    %v262 = vsel %vm179, %v261, %v260
    %v263 = vsub.s32 4, %v239
    %v264 = vsel %vm179, %v263, %v239
    %v265 = vsel %vm178, %v72, %v262
    %v266 = vsel %vm178, 0, %v264
    %v267 = vcosq.f32.pop %v265
    %v268 = vsinq.f32.pop %v265
    %vm269 = vweird.f32 %v72
    %v270 = vadd.s32 %v266, 3
    %v271 = vand.u32 %v270, 3
    %vm272 = vcmp.lt.s32.totalorder %v271, 2
    %vm273 = vcmp.eq.s32.totalorder %v271, 0
    %v274 = vxor.u32 %v268, 2147483648
    %v275 = vsel %vm273, %v267, %v274
    %vm276 = vcmp.eq.s32.totalorder %v271, 2
    %v277 = vxor.u32 %v267, 2147483648
    %v278 = vsel %vm276, %v277, %v268
    %v279 = vsel %vm272, %v275, %v278
    %v280 = vsel %vm269, nan, %v279
    %v281 = vmul.f32 %v71, %v280
    %v282 = vld [vmem:[#allocation4] sm:$0xff]
    %v283 = vadd.f32 %v282, %v176
    %284 = vst [vmem:[#allocation7] sm:$0xff] %v283
    %v285 = vld [vmem:[#allocation4 + $0x8] sm:$0xff]
    %v286 = vadd.f32 %v285, %v281
    %287 = vst [vmem:[#allocation7 + $0x8] sm:$0xff] %v286
    // Predicated region
    $region10: #{tpu_custom_call.1} parent=1 // pred_check
      _
    $region11: #{tpu_custom_call.1} parent=1 // pred_check_branch
      %289 = sbr.rel (0) target = $region13
    $region12: #{tpu_custom_call.1} parent=1 // pred_region
      %s291 = ssub.s32 256, 256
      %292 = vsyncadd [#allocation6], %s291
      %s293 = sshll.u32 [#allocation7], 4
      %s294 = int_to_ptr.vmem [resolvable:$true] %s293
      %299 = dma.vmem_to_hbm [thread:$0]  %s294, 256, %s2, [#allocation6], 128, 128, 8
    $region13: #{tpu_custom_call.1} parent=1 // pred_fallthru
      _
    // Predicated region
    $region14: #{tpu_custom_call.1} parent=1 // pred_check
      _
    $region15: #{tpu_custom_call.1} parent=1 // pred_check_branch
      %301 = sbr.rel (0) target = $region17
    $region16: #{tpu_custom_call.1} parent=1 // pred_region
      %302 = dma.done [#allocation6], 256
    $region17: #{tpu_custom_call.1} parent=1 // pred_fallthru
      _
    %303 = vsyncpa [#allocation5], 1
    %304 = vsyncpa [#allocation6], 1

</llo_original>
